<compile_context>
chip_gen: v7x
topology: tpu7x:2x2x1
jax: 0.10.0
libtpu: 0.0.40
codegen_flags: <defaults>
</compile_context>

<pallas_src>
import functools

import jax
import jax.numpy as jnp
from jax import lax
from jax.experimental import pallas as pl
from jax.experimental.pallas import tpu as pltpu

_NEG_INF = -1e30  # finite "minus infinity": avoids inf*0 NaNs, exp underflows to 0


def _round_up(x, m):
    return ((x + m - 1) // m) * m


def _representer_kernel(x_ref, w_ref, y_ref, phi_ref, *, n_rows, n_classes):
    """One batch tile: partial Phi = sum_rows( logsumexp(D) - sum(D*y) )."""
    i = pl.program_id(0)
    tb = x_ref.shape[0]
    c_pad = w_ref.shape[1]

    # MXU matmul (bf16 or f32 operands), f32 accumulation.
    d = jnp.dot(x_ref[...], w_ref[...], preferred_element_type=jnp.float32)

    # Mask padded class columns so they never win the max nor enter exp-sum/dy.
    col = lax.broadcasted_iota(jnp.int32, (tb, c_pad), 1)
    col_mask = col < n_classes
    d = jnp.where(col_mask, d, _NEG_INF)

    # Row-wise max subtraction (matches torch D - D.max(dim=1, keepdim=True)).
    d = d - jnp.max(d, axis=1, keepdims=True)

    lse = jnp.log(jnp.sum(jnp.exp(d), axis=1, keepdims=True))                 # (tb, 1)
    y = y_ref[...].astype(jnp.float32)
    dy = jnp.sum(jnp.where(col_mask, d * y, 0.0), axis=1, keepdims=True)      # (tb, 1)

    # Zero the contribution of rows that are pure batch padding.
    row = lax.broadcasted_iota(jnp.int32, (tb, 1), 0) + i * tb
    contrib = jnp.where(row < n_rows, lse - dy, 0.0)

    # Distinct lane-dense (8,128) partial-sum block per grid step (unmasked vst);
    # the wrapper reduces partials[:, 0, 0].  This keeps the batch axis parallel.
    phi_ref[...] = jnp.full(phi_ref.shape, jnp.sum(contrib), dtype=jnp.float32)


def representer_softmax(x, W, y, *, tb=512, use_bf16=True,
                        vmem_limit_bytes=64 * 1024 * 1024):
    """Pallas implementation of RepresenterSoftmax.forward.

    x: (N, F), W: (F, C), y: (N, C).  Returns (Phi, L2) f32 scalars.
    """
    N, F = x.shape
    Fw, C = W.shape
    assert Fw == F and y.shape == (N, C)

    c_pad = _round_up(C, 128)
    compute_dtype = jnp.bfloat16 if use_bf16 else jnp.float32
    xw_bytes = 2 if use_bf16 else 4

    # Batch tile: as large as requested, shrunk to fit a conservative VMEM
    # budget (double-buffered x/y, W, f32 D tile), multiple of 8.
    tb_eff = min(_round_up(tb, 8), _round_up(N, 8))
    budget = 40 * 1024 * 1024

    def _vmem_estimate(t):
        return (2 * t * F * xw_bytes          # x tile, double-buffered
                + 2 * t * c_pad * 4           # y tile (f32), double-buffered
                + 2 * F * c_pad * xw_bytes    # W (grid-invariant, still 2 bufs)
                + t * c_pad * 4               # f32 D tile
                + 2 * 8 * 128 * 4)            # output block

    while tb_eff > 8 and _vmem_estimate(tb_eff) > budget:
        tb_eff = max(8, _round_up(tb_eff // 2, 8))

    n_pad = _round_up(N, tb_eff)
    num_tiles = n_pad // tb_eff

    # Zero-pad batch rows and class columns (lane-dense layout).
    x_p = jnp.zeros((n_pad, F), compute_dtype).at[:N, :].set(x.astype(compute_dtype))
    w_p = jnp.zeros((F, c_pad), compute_dtype).at[:, :C].set(W.astype(compute_dtype))
    y_p = jnp.zeros((n_pad, c_pad), jnp.float32).at[:N, :C].set(y.astype(jnp.float32))

    kernel = functools.partial(_representer_kernel, n_rows=N, n_classes=C)

    partials = pl.pallas_call(
        kernel,
        out_shape=jax.ShapeDtypeStruct((num_tiles, 8, 128), jnp.float32),
        grid_spec=pltpu.PrefetchScalarGridSpec(
            num_scalar_prefetch=0,
            grid=(num_tiles,),
            in_specs=[
                pl.BlockSpec((tb_eff, F), lambda i: (i, 0)),      # x batch tile
                pl.BlockSpec((F, c_pad), lambda i: (0, 0)),       # full W, resident
                pl.BlockSpec((tb_eff, c_pad), lambda i: (i, 0)),  # y batch tile
            ],
            out_specs=pl.BlockSpec((1, 8, 128), lambda i: (i, 0, 0)),
        ),
        compiler_params=pltpu.CompilerParams(
            dimension_semantics=("parallel",),   # distinct output block per step
            vmem_limit_bytes=vmem_limit_bytes,
        ),
    )(x_p, w_p, y_p)

    phi = jnp.sum(partials[:, 0, 0])
    # L2 is a tiny mem-bound reduction; keep it in XLA (exact f32, matches torch).
    l2 = jnp.sum(jnp.square(W.astype(jnp.float32)))
    return phi, l2


def _reference(x, W, y):
    d = x.astype(jnp.float32) @ W.astype(jnp.float32)
    d = d - jnp.max(d, axis=1, keepdims=True)
    phi = jnp.sum(jax.scipy.special.logsumexp(d, axis=1) - jnp.sum(d * y, axis=1))
    l2 = jnp.sum(W.astype(jnp.float32) ** 2)
    return phi, l2


if __name__ == "__main__":
    key = jax.random.PRNGKey(0)
    kx, kw, ky = jax.random.split(key, 3)

    N, F, C = 16, 32, 16  # batch, features (incl. bias column), classes

    x = jax.random.normal(kx, (N, F), dtype=jnp.float32)
    W = 0.05 * jax.random.normal(kw, (F, C), dtype=jnp.float32)
    labels = jax.random.randint(ky, (N,), 0, C)
    y = jax.nn.one_hot(labels, C, dtype=jnp.float32)

    # 1) f32 MXU path: tight tolerance against the f32 reference.
    phi32, l232 = representer_softmax(x, W, y, use_bf16=False)
    phi32 = jax.block_until_ready(phi32)
    l232 = jax.block_until_ready(l232)
    phi_ref, l2_ref = _reference(x, W, y)
    assert jnp.allclose(phi32, phi_ref, rtol=1e-5, atol=1e-5), (phi32, phi_ref)
    assert jnp.allclose(l232, l2_ref, rtol=1e-6, atol=1e-6), (l232, l2_ref)

    # 2) default bf16 MXU path + ragged batch (exercises row-padding mask).
    Nr = 13
    phi16, l216 = representer_softmax(x[:Nr], W, y[:Nr], use_bf16=True)
    phi16 = jax.block_until_ready(phi16)
    l216 = jax.block_until_ready(l216)
    phi_ref_r, l2_ref_r = _reference(x[:Nr], W, y[:Nr])
    assert jnp.allclose(phi16, phi_ref_r, rtol=2e-2, atol=2e-2), (phi16, phi_ref_r)
    assert jnp.allclose(l216, l2_ref_r, rtol=1e-6, atol=1e-6), (l216, l2_ref_r)

    print("KERNEL_OK")
</pallas_src>

<mosaic_0001>
module attributes {stable_mosaic.version = 11 : i64} {
  func.func @_representer_kernel(%arg0: i32, %arg1: memref<16x32xf32, #tpu.memory_space<vmem>>, %arg2: memref<32x128xf32, #tpu.memory_space<vmem>>, %arg3: memref<16x128xf32, #tpu.memory_space<vmem>>, %arg4: memref<1x8x128xf32, #tpu.memory_space<vmem>>) attributes {dimension_semantics = [#tpu.dimension_semantics<parallel>], iteration_bounds = array<i64: 1>, scalar_prefetch = 0 : i64, scratch_operands = 0 : i64, tpu.core_type = #tpu.core_type<tc>, window_params = [{transform_indices = @transform_0, window_bounds = array<i64: 16, 32>}, {pipeline_mode = #tpu.pipeline_mode<synchronous>, transform_indices = @transform_1, window_bounds = array<i64: 32, 128>}, {transform_indices = @transform_2, window_bounds = array<i64: 16, 128>}, {transform_indices = @transform_3, window_bounds = array<i64: 1, 8, 128>}]} {
    %c0 = arith.constant 0 : index
    %c0_0 = arith.constant 0 : index
    %0 = vector.load %arg1[%c0, %c0_0] : memref<16x32xf32, #tpu.memory_space<vmem>>, vector<16x32xf32>
    %c0_1 = arith.constant 0 : index
    %c0_2 = arith.constant 0 : index
    %1 = vector.load %arg2[%c0_1, %c0_2] : memref<32x128xf32, #tpu.memory_space<vmem>>, vector<32x128xf32>
    %cst = arith.constant dense<0.000000e+00> : vector<16x128xf32>
    %2 = tpu.matmul %0, %1, %cst {dimension_numbers = #tpu.dot_dimension_numbers<[1], [0], [0], [1], [0, 0, 1, 1], [], []>} : vector<16x32xf32>, vector<32x128xf32>, vector<16x128xf32> -> vector<16x128xf32>
    %3 = tpu.iota {dimensions = array<i32: 1>} : vector<16x128xi32>
    %c16_i32 = arith.constant 16 : i32
    %4 = vector.broadcast %c16_i32 : i32 to vector<16x128xi32>
    %5 = arith.cmpi slt, %3, %4 : vector<16x128xi32>
    %cst_3 = arith.constant -1.000000e+30 : f32
    %6 = vector.broadcast %cst_3 : f32 to vector<16x128xf32>
    %7 = arith.select %5, %2, %6 : vector<16x128xi1>, vector<16x128xf32>
    %cst_4 = arith.constant dense<0xFF800000> : vector<16xf32>
    %8 = vector.multi_reduction <maximumf>, %7, %cst_4 [1] : vector<16x128xf32> to vector<16xf32>
    %9 = vector.shape_cast %8 : vector<16xf32> to vector<16x1xf32>
    %10 = vector.broadcast %9 : vector<16x1xf32> to vector<16x128xf32>
    %11 = arith.subf %7, %10 : vector<16x128xf32>
    %12 = math.exp %11 : vector<16x128xf32>
    %cst_5 = arith.constant dense<0.000000e+00> : vector<16xf32>
    %13 = vector.multi_reduction <add>, %12, %cst_5 [1] : vector<16x128xf32> to vector<16xf32>
    %14 = vector.shape_cast %13 : vector<16xf32> to vector<16x1xf32>
    %15 = math.log %14 : vector<16x1xf32>
    %c0_6 = arith.constant 0 : index
    %c0_7 = arith.constant 0 : index
    %16 = vector.load %arg3[%c0_6, %c0_7] : memref<16x128xf32, #tpu.memory_space<vmem>>, vector<16x128xf32>
    %17 = arith.mulf %11, %16 : vector<16x128xf32>
    %cst_8 = arith.constant 0.000000e+00 : f32
    %18 = vector.broadcast %cst_8 : f32 to vector<16x128xf32>
    %19 = arith.select %5, %17, %18 : vector<16x128xi1>, vector<16x128xf32>
    %cst_9 = arith.constant dense<0.000000e+00> : vector<16xf32>
    %20 = vector.multi_reduction <add>, %19, %cst_9 [1] : vector<16x128xf32> to vector<16xf32>
    %21 = vector.shape_cast %20 : vector<16xf32> to vector<16x1xf32>
    %22 = tpu.iota {dimensions = array<i32: 0>} : vector<16x1xi32>
    %c16_i32_10 = arith.constant 16 : i32
    %23 = arith.muli %arg0, %c16_i32_10 : i32
    %24 = vector.broadcast %23 : i32 to vector<16x1xi32>
    %25 = arith.addi %22, %24 : vector<16x1xi32>
    %c16_i32_11 = arith.constant 16 : i32
    %26 = vector.broadcast %c16_i32_11 : i32 to vector<16x1xi32>
    %27 = arith.cmpi slt, %25, %26 : vector<16x1xi32>
    %28 = arith.subf %15, %21 : vector<16x1xf32>
    %cst_12 = arith.constant 0.000000e+00 : f32
    %29 = vector.broadcast %cst_12 : f32 to vector<16x1xf32>
    %30 = arith.select %27, %28, %29 : vector<16x1xi1>, vector<16x1xf32>
    %31 = vector.shape_cast %30 : vector<16x1xf32> to vector<1x16x1xf32>
    %cst_13 = arith.constant dense<0.000000e+00> : vector<1xf32>
    %32 = vector.multi_reduction <add>, %31, %cst_13 [1, 2] : vector<1x16x1xf32> to vector<1xf32>
    %33 = vector.shape_cast %32 : vector<1xf32> to vector<1x1x1xf32>
    %34 = vector.extract %33[0, 0, 0] : f32 from vector<1x1x1xf32>
    %35 = vector.broadcast %34 : f32 to vector<1x8x128xf32>
    %c0_14 = arith.constant 0 : index
    %c0_15 = arith.constant 0 : index
    %c0_16 = arith.constant 0 : index
    %36 = vector.load %arg4[%c0_14, %c0_15, %c0_16] : memref<1x8x128xf32, #tpu.memory_space<vmem>>, vector<1x8x128xf32>
    tpu.vector_store %arg4[%c0_14, %c0_15, %c0_16], %35 {strides = array<i32>} : memref<1x8x128xf32, #tpu.memory_space<vmem>>, vector<1x8x128xf32>,
    return
  }
  func.func @transform_0(%arg0: i32) -> (i32, i32) {
    %c0_i32 = arith.constant 0 : i32
    %c0_i32_0 = arith.constant 0 : i32
    return %arg0, %c0_i32 : i32, i32
  }
  func.func @transform_1(%arg0: i32) -> (i32, i32) {
    %c0_i32 = arith.constant 0 : i32
    %c0_i32_0 = arith.constant 0 : i32
    %c0_i32_1 = arith.constant 0 : i32
    return %c0_i32, %c0_i32_0 : i32, i32
  }
  func.func @transform_2(%arg0: i32) -> (i32, i32) {
    %c0_i32 = arith.constant 0 : i32
    %c0_i32_0 = arith.constant 0 : i32
    return %arg0, %c0_i32 : i32, i32
  }
  func.func @transform_3(%arg0: i32) -> (i32, i32, i32) {
    %c0_i32 = arith.constant 0 : i32
    %c0_i32_0 = arith.constant 0 : i32
    %c0_i32_1 = arith.constant 0 : i32
    return %arg0, %c0_i32, %c0_i32_0 : i32, i32, i32
  }
}

</mosaic_0001>

<llo_original>
// kernel: tpu_custom_call.1
$region0: #{tpu_custom_call.1}
  #allocation0 [shape = 'u32[]', space=smem, size = 0x4, offset = 0x4, fixed_abs, tag = 'smem constant byte address 0x4 - core index']
  #allocation1 [shape = 'u32[144,128]{1,0:T(1,128)}', space=vmem, size = 0x12000, scoped, tag = 'internal scratch']
  %s0 = inlined_call_operand.hbm [shape: f32[16,32], index: 0, kind: input, shape index: {}]
  %s1 = inlined_call_operand.hbm [shape: f32[32,128], index: 1, kind: input, shape index: {}]
  %s2 = inlined_call_operand.hbm [shape: f32[16,128], index: 2, kind: input, shape index: {}]
  %s3 = inlined_call_operand.hbm [shape: f32[1,8,128], index: 3, kind: output, shape index: {}]
  %s4 = sld [smem:[#allocation0]]
  $region34: #{tpu_custom_call.1} parent=0
    _
  %s6 = ssub.s32 1, %s4
  %s7 = scalar_select 0, %s6, %s4
  $region1: #{tpu_custom_call.1} parent=0
    #allocation2 [shape = 'u8[8192]{0}', space=vmem, size = 0x2000, scoped, tag = 'input window, operand 0, single buffered']
    #allocation3 [shape = 's32[1]{0}', space=sflag, size = 0x4, scoped, tag = 'scoped memory for tpu_custom_call.1']
    #allocation4 [shape = 's32[1]{0}', space=sflag, size = 0x4, scoped, tag = 'scoped memory for tpu_custom_call.1']
    #allocation5 [shape = 'u8[16384]{0}', space=vmem, size = 0x4000, scoped, tag = 'input window, operand 1, single buffered']
    #allocation6 [shape = 's32[1]{0}', space=sflag, size = 0x4, scoped, tag = 'scoped memory for tpu_custom_call.1']
    #allocation7 [shape = 'u8[8192]{0}', space=vmem, size = 0x2000, scoped, tag = 'input window, operand 2, single buffered']
    #allocation8 [shape = 'u8[4096]{0}', space=vmem, size = 0x1000, scoped, tag = 'output window, operand 0, single buffered']
    %8 = vsyncpa [#allocation3], 0
    %9 = vsyncpa [#allocation6], 0
    %10 = vsyncpa [#allocation4], 0
    // Predicated region
    $region2: #{tpu_custom_call.1} parent=1 // pred_check
      _
    $region3: #{tpu_custom_call.1} parent=1 // pred_check_branch
      %12 = sbr.rel (0) target = $region5
    $region4: #{tpu_custom_call.1} parent=1 // pred_region
      %s14 = ssub.s32 256, 256
      %15 = vsyncadd [#allocation3], %s14
      %s16 = sshll.u32 [#allocation2], 4
      %s17 = int_to_ptr.vmem [resolvable:$true] %s16
      %22 = dma.hbm_to_vmem [thread:$0]  %s0, 256, %s17, [#allocation3], 128, 128, 8
    $region5: #{tpu_custom_call.1} parent=1 // pred_fallthru
      _
    // Predicated region
    $region6: #{tpu_custom_call.1} parent=1 // pred_check
      _
    $region7: #{tpu_custom_call.1} parent=1 // pred_check_branch
      %24 = sbr.rel (0) target = $region9
    $region8: #{tpu_custom_call.1} parent=1 // pred_region
      %s26 = ssub.s32 512, 512
      %27 = vsyncadd [#allocation6], %s26
      %s28 = sshll.u32 [#allocation5], 4
      %s29 = int_to_ptr.vmem [resolvable:$true] %s28
      %34 = dma.hbm_to_vmem [thread:$0]  %s1, 512, %s29, [#allocation6], 128, 128, 8
    $region9: #{tpu_custom_call.1} parent=1 // pred_fallthru
      _
    // Predicated region
    $region10: #{tpu_custom_call.1} parent=1 // pred_check
      _
    $region11: #{tpu_custom_call.1} parent=1 // pred_check_branch
      %36 = sbr.rel (0) target = $region13
    $region12: #{tpu_custom_call.1} parent=1 // pred_region
      %s38 = ssub.s32 256, 256
      %39 = vsyncadd [#allocation6], %s38
      %s40 = sshll.u32 [#allocation7], 4
      %s41 = int_to_ptr.vmem [resolvable:$true] %s40
      %46 = dma.hbm_to_vmem [thread:$0]  %s2, 256, %s41, [#allocation6], 128, 128, 8
    $region13: #{tpu_custom_call.1} parent=1 // pred_fallthru
      _
    // Predicated region
    $region14: #{tpu_custom_call.1} parent=1 // pred_check
      _
    $region15: #{tpu_custom_call.1} parent=1 // pred_check_branch
      %48 = sbr.rel (0) target = $region17
    $region16: #{tpu_custom_call.1} parent=1 // pred_region
      %49 = dma.done [#allocation3], 256
    $region17: #{tpu_custom_call.1} parent=1 // pred_fallthru
      _
    // Predicated region
    $region18: #{tpu_custom_call.1} parent=1 // pred_check
      _
    $region19: #{tpu_custom_call.1} parent=1 // pred_check_branch
      %51 = sbr.rel (0) target = $region21
    $region20: #{tpu_custom_call.1} parent=1 // pred_region
      %52 = dma.done [#allocation6], 512
    $region21: #{tpu_custom_call.1} parent=1 // pred_fallthru
      _
    // Predicated region
    $region22: #{tpu_custom_call.1} parent=1 // pred_check
      _
    $region23: #{tpu_custom_call.1} parent=1 // pred_check_branch
      %54 = sbr.rel (0) target = $region25
    $region24: #{tpu_custom_call.1} parent=1 // pred_region
      %55 = dma.done [#allocation6], 256
    $region25: #{tpu_custom_call.1} parent=1 // pred_fallthru
      _
    %v56 = vld [vmem:[#allocation2] sm:$0xff]
    %v57 = vld [vmem:[#allocation2 + $0x8] sm:$0xff]
    %v58 = vld [vmem:[#allocation5] sm:$0xff]
    %v59 = vld [vmem:[#allocation5 + $0x8] sm:$0xff]
    %v60 = vld [vmem:[#allocation5 + $0x10] sm:$0xff]
    %v61 = vld [vmem:[#allocation5 + $0x18] sm:$0xff]
    %vm62 = vcmask 261120
    %v64 = vsel %vm62, %v56, 0
    %v67 = vsel %vm62, %v57, 0
    %69 = vmatprep.subr.mxu0 0.0
    %70 = vmatpush1.msra.mxu0 %v58
    %71 = vmatprep.subr.mxu0 0.0
    %72 = vmatpush1.msra.mxu0 %v59
    %73 = vmatprep.subr.mxu0 0.0
    %74 = vmatpush1.msra.mxu0 %v60
    %75 = vmatprep.subr.mxu0 0.0
    %76 = vmatpush1.msra.mxu0 %v61
    %77 = vmatprep.subr.mxu0 0.0
    %78 = vmatpush1.msra.mxu0 0.0
    %79 = vmatprep.subr.mxu0 0.0
    %80 = vmatpush1.msra.mxu0 0.0
    %81 = vmatprep.subr.mxu0 0.0
    %82 = vmatpush1.msra.mxu0 0.0
    %83 = vmatprep.subr.mxu0 0.0
    %84 = vmatpush1.msra.mxu0 0.0
    %85 = vmatprep.subr.mxu0 0.0
    %86 = vmatpush1.msra.mxu0 0.0
    %87 = vmatprep.subr.mxu0 0.0
    %88 = vmatpush1.msra.mxu0 0.0
    %89 = vmatprep.subr.mxu0 0.0
    %90 = vmatpush1.msra.mxu0 0.0
    %91 = vmatprep.subr.mxu0 0.0
    %92 = vmatpush1.msra.mxu0 0.0
    %93 = vmatprep.subr.mxu0 0.0
    %94 = vmatpush1.msra.mxu0 0.0
    %95 = vmatprep.subr.mxu0 0.0
    %96 = vmatpush1.msra.mxu0 0.0
    %97 = vmatprep.subr.mxu0 0.0
    %98 = vmatpush1.msra.mxu0 0.0
    %99 = vmatprep.subr.mxu0 0.0
    %100 = vmatpush1.msra.mxu0 0.0
    %101 = vmatprep.subr.mxu0 0.0
    %102 = vmatpush1.msra.mxu0 0.0
    %103 = vmatprep.subr.mxu0 0.0
    %104 = vmatpush1.msra.mxu0 0.0
    %105 = vmatprep.subr.mxu0 0.0
    %106 = vmatpush1.msra.mxu0 0.0
    %107 = vmatprep.subr.mxu0 0.0
    %108 = vmatpush1.msra.mxu0 0.0
    %109 = vmatprep.subr.mxu0 0.0
    %110 = vmatpush1.msra.mxu0 0.0
    %111 = vmatprep.subr.mxu0 0.0
    %112 = vmatpush1.msra.mxu0 0.0
    %113 = vmatprep.subr.mxu0 0.0
    %114 = vmatpush1.msra.mxu0 0.0
    %115 = vmatprep.subr.mxu0 0.0
    %116 = vmatpush1.msra.mxu0 0.0
    %117 = vmatprep.subr.mxu0 0.0
    %118 = vmatpush1.msra.mxu0 0.0
    %119 = vmatprep.subr.mxu0 0.0
    %120 = vmatpush1.msra.mxu0 0.0
    %121 = vmatprep.subr.mxu0 0.0
    %122 = vmatpush1.msra.mxu0 0.0
    %123 = vmatprep.subr.mxu0 0.0
    %124 = vmatpush1.msra.mxu0 0.0
    %125 = vmatprep.subr.mxu0 0.0
    %126 = vmatpush1.msra.mxu0 0.0
    %127 = vmatprep.subr.mxu0 0.0
    %128 = vmatpush1.msra.mxu0 0.0
    %129 = vmatprep.subr.mxu0 0.0
    %130 = vmatpush1.msra.mxu0 0.0
    %131 = vmatprep.subr.mxu0 0.0
    %132 = vmatpush1.msra.mxu0 0.0
    %133 = vmatprep.mubr.f32.mxu0 0.0
    %134 = vmatmul.mubr.f32.gmra.mrb[0].mxu0 %v64
    %v135 = vpop.f32.mrb[0].mxu0
    %v136 = vadd.f32 0.0, %v135
    %v137 = vpop.f32.mrb[0].mxu0
    %138 = vmatprep.mubr.f32.mxu0 0.0
    %139 = vmatmul.mubr.f32.gmra.mrb[0].mxu0 %v67
    %v140 = vpop.f32.mrb[0].mxu0
    %v141 = vadd.f32 0.0, %v140
    %v142 = vpop.f32.mrb[0].mxu0
    %143 = vdwg.mxu0
    %v144 = vlaneseq
    %v145 = vand.u32 %v144, 127
    %vm146 = vcmp.lt.s32.totalorder %v145, 16
    %v147 = vsel %vm146, %v136, -1e+30
    %v148 = vsel %vm146, %v141, -1e+30
    %149 = vmax.xlane.f32.xlu0 %v147
    %v150 = vpop.xlane.xlu0 %149
    %151 = vmax.xlane.f32.xlu0 %v148
    %v152 = vpop.xlane.xlu0 %151
    %v153 = vsub.f32 %v147, %v150
    %v154 = vsub.f32 %v148, %v152
    %v155 = vmul.f32 %v153, 1.442695
    %v156 = vpow.pop %v155
    %v157 = vmul.f32 %v154, 1.442695
    %v158 = vpow.pop %v157
    %159 = vadd.xlane.f32.xlu0 %v156
    %v160 = vpop.xlane.xlu0 %159
    %161 = vadd.xlane.f32.xlu0 %v158
    %v162 = vpop.xlane.xlu0 %161
    %v163 = vlog2.pop %v160
    %v164 = vmul.f32 %v163, 0.6931472
    %v165 = vlog2.pop %v162
    %v166 = vmul.f32 %v165, 0.6931472
    %v167 = vld [vmem:[#allocation7] sm:$0xff]
    %v168 = vld [vmem:[#allocation7 + $0x8] sm:$0xff]
    %v169 = vmul.f32 %v153, %v167
    %v170 = vmul.f32 %v154, %v168
    %v171 = vsel %vm146, %v169, 0.0
    %v172 = vsel %vm146, %v170, 0.0
    %173 = vadd.xlane.f32.xlu0 %v171
    %v174 = vpop.xlane.xlu0 %173
    %175 = vadd.xlane.f32.xlu0 %v172
    %v176 = vpop.xlane.xlu0 %175
    %v177 = vlaneseq
    %v178 = vshrl.u32 %v177, 7
    %v179 = vadd.s32 %v178, 8
    %s180 = smul.u32 0, 16
    %v181 = vstv %s180
    %v182 = vadd.s32 %v178, %v181
    %v183 = vadd.s32 %v179, %v181
    %vm184 = vcmp.lt.s32.totalorder %v182, 16
    %vm185 = vcmp.lt.s32.totalorder %v183, 16
    %v186 = vsub.f32 %v164, %v174
    %v187 = vsub.f32 %v166, %v176
    %v188 = vsel %vm184, %v186, 0.0
    %v189 = vsel %vm185, %v187, 0.0
    %vm190 = vcmask 7168
    %v191 = vsel %vm190, %v188, 0.0
    %v192 = vsel %vm190, %v189, 0.0
    %v193 = vadd.f32 %v191, %v192
    %194 = vadd.xlane.f32.xlu0 %v193
    %v195 = vpop.xlane.xlu0 %194
    %v196 = vrot.slane %v195, 4
    %v197 = vadd.f32 %v195, %v196
    %v198 = vrot.slane %v197, 2
    %v199 = vadd.f32 %v197, %v198
    %v200 = vrot.slane %v199, 1
    %v201 = vadd.f32 %v199, %v200
    %s202 = vtos %v201
    %v203 = vstv %s202
    %204 = vst [vmem:[#allocation8] sm:$0xff] %v203
    // Predicated region
    $region26: #{tpu_custom_call.1} parent=1 // pred_check
      _
    $region27: #{tpu_custom_call.1} parent=1 // pred_check_branch
      %206 = sbr.rel (0) target = $region29
    $region28: #{tpu_custom_call.1} parent=1 // pred_region
      %s208 = ssub.s32 128, 128
      %209 = vsyncadd [#allocation4], %s208
      %s211 = sshll.u32 [#allocation8], 4
      %s212 = int_to_ptr.vmem [resolvable:$true] %s211
      %214 = dma.vmem_to_hbm [thread:$0]  %s212, 128, %s3, [#allocation4]
    $region29: #{tpu_custom_call.1} parent=1 // pred_fallthru
      _
    // Predicated region
    $region30: #{tpu_custom_call.1} parent=1 // pred_check
      _
    $region31: #{tpu_custom_call.1} parent=1 // pred_check_branch
      %216 = sbr.rel (0) target = $region33
    $region32: #{tpu_custom_call.1} parent=1 // pred_region
      %217 = dma.done [#allocation4], 128
    $region33: #{tpu_custom_call.1} parent=1 // pred_fallthru
      _
    %218 = vsyncpa [#allocation3], 1
    %219 = vsyncpa [#allocation6], 1
    %220 = vsyncpa [#allocation4], 1

</llo_original>
